<compile_context>
chip_gen: v6e
topology: v6e:2x2x1
jax: 0.10.0
libtpu: 0.0.40
codegen_flags: <defaults>
</compile_context>

<pallas_src>
import jax
import jax.numpy as jnp
import numpy as np
from jax.experimental import pallas as pl
from jax.experimental.pallas import tpu as pltpu

INPUT_DIM = 3
HIDDEN_DIM = 128
OUTPUT_DIM = 8
MAX_TB = 2048        # max batch tile (multiple of 8)

OUTPUT_NAMES = ['eta_CO2_des', 'SEEC', 'CO2_out (%)', 'Voltage (V)', 'pH1',
                'Conductivity (mS/cm)', 'Temp (°C)', 'Solvent Flow (ml/min)']


def _cdiv(a, b):
    return -(-a // b)


def _round_up(n, m):
    return _cdiv(n, m) * m


def _num_tensorcores():
    """Best-effort TensorCore-per-chip count (2 on v7x, else 1)."""
    try:
        kind = jax.devices()[0].device_kind.lower()
        if "v7" in kind:
            return 2
    except Exception:
        pass
    return 1


def _choose_tiling(B, max_tb, num_tc):
    """Pick (tb, b_pad, grid_steps) minimizing padding; split for multi-TC."""
    g = _cdiv(B, max_tb)
    # Ensure the "parallel" batch axis has enough steps to feed every
    # TensorCore, but never split batches that are too small to matter.
    if num_tc > 1 and B >= num_tc * 128:
        g = max(g, num_tc)
        g = _round_up(g, num_tc)
    tb = _round_up(_cdiv(B, g), 8)
    b_pad = g * tb
    return tb, b_pad, g


def _mlp_kernel(x_ref, w1_ref, b1_ref, w2_ref, b2_ref, w3_ref, b3_ref,
                w4_ref, b4_ref, o_ref):
    """Fused 4-layer MLP on one (TB, *) batch tile; weights VMEM-resident."""
    x = x_ref[...]                                   # (TB, 3) f32
    # Layer 1 (K=3): broadcasted VPU multiply-adds (no padded/tiny-K matmul).
    h = (x[:, 0:1] * w1_ref[0:1, :]
         + x[:, 1:2] * w1_ref[1:2, :]
         + x[:, 2:3] * w1_ref[2:3, :]
         + b1_ref[...])
    h = jnp.maximum(h, 0.0)                          # f32
    # Layers 2-4: MXU matmuls. Weight dtype decides f32 vs bf16 inputs;
    # accumulation is always f32; bias-add/ReLU always f32.
    mm_dtype = w2_ref.dtype
    h = jnp.dot(h.astype(mm_dtype), w2_ref[...],
                preferred_element_type=jnp.float32) + b2_ref[...]
    h = jnp.maximum(h, 0.0)
    h = jnp.dot(h.astype(mm_dtype), w3_ref[...],
                preferred_element_type=jnp.float32) + b3_ref[...]
    h = jnp.maximum(h, 0.0)
    out = jnp.dot(h.astype(mm_dtype), w4_ref[...],
                  preferred_element_type=jnp.float32) + b4_ref[...]
    o_ref[...] = out.astype(o_ref.dtype)             # (TB, 8) store only


def pinn_forward(x, params, *, max_tb=MAX_TB, use_bf16=False):
    """x: (B, INPUT_DIM) float32. Returns (B, OUTPUT_DIM) float32."""
    B = x.shape[0]
    w1, b1, w2, b2, w3, b3, w4, b4 = params
    if use_bf16:
        w2 = w2.astype(jnp.bfloat16)
        w3 = w3.astype(jnp.bfloat16)
        w4 = w4.astype(jnp.bfloat16)

    num_tc = _num_tensorcores()
    tb, b_pad, grid_steps = _choose_tiling(B, max_tb, num_tc)
    if b_pad != B:
        x = jnp.pad(x, ((0, b_pad - B), (0, 0)))

    def resident(shape):
        # Full-shape block, constant block index -> stays in VMEM across steps.
        return pl.BlockSpec(shape, lambda i: (0, 0))

    flops = int(2 * b_pad * (INPUT_DIM * HIDDEN_DIM
                             + 2 * HIDDEN_DIM * HIDDEN_DIM
                             + HIDDEN_DIM * OUTPUT_DIM))
    weight_bytes = sum(int(a.size) * a.dtype.itemsize
                       for a in (w1, b1, w2, b2, w3, b3, w4, b4))
    bytes_accessed = int(4 * b_pad * (INPUT_DIM + OUTPUT_DIM)) + weight_bytes

    out = pl.pallas_call(
        _mlp_kernel,
        out_shape=jax.ShapeDtypeStruct((b_pad, OUTPUT_DIM), jnp.float32),
        grid=(grid_steps,),
        in_specs=[
            pl.BlockSpec((tb, INPUT_DIM), lambda i: (i, 0)),   # x: pipelined
            resident((INPUT_DIM, HIDDEN_DIM)),                 # w1
            resident((1, HIDDEN_DIM)),                         # b1
            resident((HIDDEN_DIM, HIDDEN_DIM)),                # w2
            resident((1, HIDDEN_DIM)),                         # b2
            resident((HIDDEN_DIM, HIDDEN_DIM)),                # w3
            resident((1, HIDDEN_DIM)),                         # b3
            resident((HIDDEN_DIM, OUTPUT_DIM)),                # w4
            resident((1, OUTPUT_DIM)),                         # b4
        ],
        out_specs=pl.BlockSpec((tb, OUTPUT_DIM), lambda i: (i, 0)),
        compiler_params=pltpu.CompilerParams(
            dimension_semantics=("parallel",),
            vmem_limit_bytes=32 * 1024 * 1024),
        cost_estimate=pl.CostEstimate(
            flops=flops, transcendentals=0, bytes_accessed=bytes_accessed),
    )(x, w1, b1, w2, b2, w3, b3, w4, b4)

    return out[:B]


def init_params(key):
    """Deterministic init mirroring nn.Linear shapes (stored as (in, out))."""
    ks = jax.random.split(key, 8)

    def linear(kw, kb, fan_in, fan_out):
        bound = 1.0 / np.sqrt(fan_in)
        w = jax.random.uniform(kw, (fan_in, fan_out), jnp.float32, -bound, bound)
        b = jax.random.uniform(kb, (1, fan_out), jnp.float32, -bound, bound)
        return w, b

    w1, b1 = linear(ks[0], ks[1], INPUT_DIM, HIDDEN_DIM)
    w2, b2 = linear(ks[2], ks[3], HIDDEN_DIM, HIDDEN_DIM)
    w3, b3 = linear(ks[4], ks[5], HIDDEN_DIM, HIDDEN_DIM)
    w4, b4 = linear(ks[6], ks[7], HIDDEN_DIM, OUTPUT_DIM)
    return (w1, b1, w2, b2, w3, b3, w4, b4)


def _reference(x, params, mm_dtype=jnp.float32):
    """Pure-JAX reference. mm_dtype=bfloat16 mirrors the kernel's bf16 path."""
    w1, b1, w2, b2, w3, b3, w4, b4 = params
    h = jnp.maximum(x @ w1 + b1, 0.0)
    h = jnp.dot(h.astype(mm_dtype), w2.astype(mm_dtype),
                preferred_element_type=jnp.float32) + b2
    h = jnp.maximum(h, 0.0)
    h = jnp.dot(h.astype(mm_dtype), w3.astype(mm_dtype),
                preferred_element_type=jnp.float32) + b3
    h = jnp.maximum(h, 0.0)
    return jnp.dot(h.astype(mm_dtype), w4.astype(mm_dtype),
                   preferred_element_type=jnp.float32) + b4


def predict_named(x, params, **kw):
    out = pinn_forward(x, params, **kw)
    return {name: out[:, i] for i, name in enumerate(OUTPUT_NAMES)}


if __name__ == "__main__":
    key = jax.random.PRNGKey(0)
    k_param, k_x = jax.random.split(key)
    params = init_params(k_param)

    # --- Test 1: f32 path, B multiple of 8 (exact PyTorch-module numerics) ---
    B = 8
    x = jax.random.normal(k_x, (B, INPUT_DIM), jnp.float32)
    out = jax.block_until_ready(pinn_forward(x, params))
    ref = _reference(x, params)
    np.testing.assert_allclose(np.asarray(out), np.asarray(ref),
                               rtol=1e-5, atol=1e-5)
    assert out.shape == (B, OUTPUT_DIM)

    # --- Test 2: f32 path, ragged batch (padding path) ---
    B2 = 13
    x2 = jax.random.normal(jax.random.PRNGKey(1), (B2, INPUT_DIM), jnp.float32)
    out2 = jax.block_until_ready(pinn_forward(x2, params))
    np.testing.assert_allclose(np.asarray(out2), np.asarray(_reference(x2, params)),
                               rtol=1e-5, atol=1e-5)
    assert out2.shape == (B2, OUTPUT_DIM)

    # --- Test 3: multi-step grid (resident weights across grid iterations) ---
    B3 = 24
    x3 = jax.random.normal(jax.random.PRNGKey(2), (B3, INPUT_DIM), jnp.float32)
    out3 = jax.block_until_ready(pinn_forward(x3, params, max_tb=8))
    np.testing.assert_allclose(np.asarray(out3), np.asarray(_reference(x3, params)),
                               rtol=1e-5, atol=1e-5)

    # --- Test 4: bf16 matmul fast path vs bf16-aware reference ---
    out_bf = jax.block_until_ready(pinn_forward(x, params, use_bf16=True))
    ref_bf = _reference(x, params, mm_dtype=jnp.bfloat16)
    np.testing.assert_allclose(np.asarray(out_bf), np.asarray(ref_bf),
                               rtol=2e-3, atol=2e-3)

    named = predict_named(x, params)
    assert set(named.keys()) == set(OUTPUT_NAMES)

    print("KERNEL_OK")
</pallas_src>

<mosaic_0001>
module attributes {stable_mosaic.version = 11 : i64} {
  func.func @_mlp_kernel(%arg0: i32, %arg1: memref<8x3xf32, #tpu.memory_space<vmem>>, %arg2: memref<3x128xf32, #tpu.memory_space<vmem>>, %arg3: memref<1x128xf32, #tpu.memory_space<vmem>>, %arg4: memref<128x128xf32, #tpu.memory_space<vmem>>, %arg5: memref<1x128xf32, #tpu.memory_space<vmem>>, %arg6: memref<128x128xf32, #tpu.memory_space<vmem>>, %arg7: memref<1x128xf32, #tpu.memory_space<vmem>>, %arg8: memref<128x8xf32, #tpu.memory_space<vmem>>, %arg9: memref<1x8xf32, #tpu.memory_space<vmem>>, %arg10: memref<8x8xf32, #tpu.memory_space<vmem>>) attributes {dimension_semantics = [#tpu.dimension_semantics<parallel>], iteration_bounds = array<i64: 1>, scalar_prefetch = 0 : i64, scratch_operands = 0 : i64, tpu.core_type = #tpu.core_type<tc>, window_params = [{transform_indices = @transform_0, window_bounds = array<i64: 8, 3>}, {pipeline_mode = #tpu.pipeline_mode<synchronous>, transform_indices = @transform_1, window_bounds = array<i64: 3, 128>}, {pipeline_mode = #tpu.pipeline_mode<synchronous>, transform_indices = @transform_2, window_bounds = array<i64: 1, 128>}, {pipeline_mode = #tpu.pipeline_mode<synchronous>, transform_indices = @transform_3, window_bounds = array<i64: 128, 128>}, {pipeline_mode = #tpu.pipeline_mode<synchronous>, transform_indices = @transform_4, window_bounds = array<i64: 1, 128>}, {pipeline_mode = #tpu.pipeline_mode<synchronous>, transform_indices = @transform_5, window_bounds = array<i64: 128, 128>}, {pipeline_mode = #tpu.pipeline_mode<synchronous>, transform_indices = @transform_6, window_bounds = array<i64: 1, 128>}, {pipeline_mode = #tpu.pipeline_mode<synchronous>, transform_indices = @transform_7, window_bounds = array<i64: 128, 8>}, {pipeline_mode = #tpu.pipeline_mode<synchronous>, transform_indices = @transform_8, window_bounds = array<i64: 1, 8>}, {transform_indices = @transform_9, window_bounds = array<i64: 8, 8>}]} {
    %c0 = arith.constant 0 : index
    %c0_0 = arith.constant 0 : index
    %0 = vector.load %arg1[%c0, %c0_0] : memref<8x3xf32, #tpu.memory_space<vmem>>, vector<8x3xf32>
    %1 = vector.extract_strided_slice %0 {offsets = [0, 0], sizes = [8, 1], strides = [1, 1]} : vector<8x3xf32> to vector<8x1xf32>
    %c0_1 = arith.constant 0 : index
    %c0_2 = arith.constant 0 : index
    %2 = vector.load %arg2[%c0_1, %c0_2] : memref<3x128xf32, #tpu.memory_space<vmem>>, vector<1x128xf32>
    %3 = vector.broadcast %1 : vector<8x1xf32> to vector<8x128xf32>
    %4 = vector.broadcast %2 : vector<1x128xf32> to vector<8x128xf32>
    %5 = arith.mulf %3, %4 : vector<8x128xf32>
    %6 = vector.extract_strided_slice %0 {offsets = [0, 1], sizes = [8, 1], strides = [1, 1]} : vector<8x3xf32> to vector<8x1xf32>
    %c1 = arith.constant 1 : index
    %c0_3 = arith.constant 0 : index
    %7 = vector.load %arg2[%c1, %c0_3] : memref<3x128xf32, #tpu.memory_space<vmem>>, vector<1x128xf32>
    %8 = vector.broadcast %6 : vector<8x1xf32> to vector<8x128xf32>
    %9 = vector.broadcast %7 : vector<1x128xf32> to vector<8x128xf32>
    %10 = arith.mulf %8, %9 : vector<8x128xf32>
    %11 = arith.addf %5, %10 : vector<8x128xf32>
    %12 = vector.extract_strided_slice %0 {offsets = [0, 2], sizes = [8, 1], strides = [1, 1]} : vector<8x3xf32> to vector<8x1xf32>
    %c2 = arith.constant 2 : index
    %c0_4 = arith.constant 0 : index
    %13 = vector.load %arg2[%c2, %c0_4] : memref<3x128xf32, #tpu.memory_space<vmem>>, vector<1x128xf32>
    %14 = vector.broadcast %12 : vector<8x1xf32> to vector<8x128xf32>
    %15 = vector.broadcast %13 : vector<1x128xf32> to vector<8x128xf32>
    %16 = arith.mulf %14, %15 : vector<8x128xf32>
    %17 = arith.addf %11, %16 : vector<8x128xf32>
    %c0_5 = arith.constant 0 : index
    %c0_6 = arith.constant 0 : index
    %18 = vector.load %arg3[%c0_5, %c0_6] : memref<1x128xf32, #tpu.memory_space<vmem>>, vector<1x128xf32>
    %19 = vector.broadcast %18 : vector<1x128xf32> to vector<8x128xf32>
    %20 = arith.addf %17, %19 : vector<8x128xf32>
    %cst = arith.constant 0.000000e+00 : f32
    %21 = vector.broadcast %cst : f32 to vector<8x128xf32>
    %22 = arith.maximumf %20, %21 : vector<8x128xf32>
    %c0_7 = arith.constant 0 : index
    %c0_8 = arith.constant 0 : index
    %23 = vector.load %arg4[%c0_7, %c0_8] : memref<128x128xf32, #tpu.memory_space<vmem>>, vector<128x128xf32>
    %cst_9 = arith.constant dense<0.000000e+00> : vector<8x128xf32>
    %24 = tpu.matmul %22, %23, %cst_9 {dimension_numbers = #tpu.dot_dimension_numbers<[1], [0], [0], [1], [0, 0, 1, 1], [], []>} : vector<8x128xf32>, vector<128x128xf32>, vector<8x128xf32> -> vector<8x128xf32>
    %c0_10 = arith.constant 0 : index
    %c0_11 = arith.constant 0 : index
    %25 = vector.load %arg5[%c0_10, %c0_11] : memref<1x128xf32, #tpu.memory_space<vmem>>, vector<1x128xf32>
    %26 = vector.broadcast %25 : vector<1x128xf32> to vector<8x128xf32>
    %27 = arith.addf %24, %26 : vector<8x128xf32>
    %cst_12 = arith.constant 0.000000e+00 : f32
    %28 = vector.broadcast %cst_12 : f32 to vector<8x128xf32>
    %29 = arith.maximumf %27, %28 : vector<8x128xf32>
    %c0_13 = arith.constant 0 : index
    %c0_14 = arith.constant 0 : index
    %30 = vector.load %arg6[%c0_13, %c0_14] : memref<128x128xf32, #tpu.memory_space<vmem>>, vector<128x128xf32>
    %cst_15 = arith.constant dense<0.000000e+00> : vector<8x128xf32>
    %31 = tpu.matmul %29, %30, %cst_15 {dimension_numbers = #tpu.dot_dimension_numbers<[1], [0], [0], [1], [0, 0, 1, 1], [], []>} : vector<8x128xf32>, vector<128x128xf32>, vector<8x128xf32> -> vector<8x128xf32>
    %c0_16 = arith.constant 0 : index
    %c0_17 = arith.constant 0 : index
    %32 = vector.load %arg7[%c0_16, %c0_17] : memref<1x128xf32, #tpu.memory_space<vmem>>, vector<1x128xf32>
    %33 = vector.broadcast %32 : vector<1x128xf32> to vector<8x128xf32>
    %34 = arith.addf %31, %33 : vector<8x128xf32>
    %cst_18 = arith.constant 0.000000e+00 : f32
    %35 = vector.broadcast %cst_18 : f32 to vector<8x128xf32>
    %36 = arith.maximumf %34, %35 : vector<8x128xf32>
    %c0_19 = arith.constant 0 : index
    %c0_20 = arith.constant 0 : index
    %37 = vector.load %arg8[%c0_19, %c0_20] : memref<128x8xf32, #tpu.memory_space<vmem>>, vector<128x8xf32>
    %cst_21 = arith.constant dense<0.000000e+00> : vector<8x8xf32>
    %38 = tpu.matmul %36, %37, %cst_21 {dimension_numbers = #tpu.dot_dimension_numbers<[1], [0], [0], [1], [0, 0, 1, 1], [], []>} : vector<8x128xf32>, vector<128x8xf32>, vector<8x8xf32> -> vector<8x8xf32>
    %c0_22 = arith.constant 0 : index
    %c0_23 = arith.constant 0 : index
    %39 = vector.load %arg9[%c0_22, %c0_23] : memref<1x8xf32, #tpu.memory_space<vmem>>, vector<1x8xf32>
    %40 = vector.broadcast %39 : vector<1x8xf32> to vector<8x8xf32>
    %41 = arith.addf %38, %40 : vector<8x8xf32>
    %c0_24 = arith.constant 0 : index
    %c0_25 = arith.constant 0 : index
    %42 = vector.load %arg10[%c0_24, %c0_25] : memref<8x8xf32, #tpu.memory_space<vmem>>, vector<8x8xf32>
    tpu.vector_store %arg10[%c0_24, %c0_25], %41 {strides = array<i32>} : memref<8x8xf32, #tpu.memory_space<vmem>>, vector<8x8xf32>,
    return
  }
  func.func @transform_0(%arg0: i32) -> (i32, i32) {
    %c0_i32 = arith.constant 0 : i32
    %c0_i32_0 = arith.constant 0 : i32
    return %arg0, %c0_i32 : i32, i32
  }
  func.func @transform_1(%arg0: i32) -> (i32, i32) {
    %c0_i32 = arith.constant 0 : i32
    %c0_i32_0 = arith.constant 0 : i32
    %c0_i32_1 = arith.constant 0 : i32
    return %c0_i32, %c0_i32_0 : i32, i32
  }
  func.func @transform_2(%arg0: i32) -> (i32, i32) {
    %c0_i32 = arith.constant 0 : i32
    %c0_i32_0 = arith.constant 0 : i32
    %c0_i32_1 = arith.constant 0 : i32
    return %c0_i32, %c0_i32_0 : i32, i32
  }
  func.func @transform_3(%arg0: i32) -> (i32, i32) {
    %c0_i32 = arith.constant 0 : i32
    %c0_i32_0 = arith.constant 0 : i32
    %c0_i32_1 = arith.constant 0 : i32
    return %c0_i32, %c0_i32_0 : i32, i32
  }
  func.func @transform_4(%arg0: i32) -> (i32, i32) {
    %c0_i32 = arith.constant 0 : i32
    %c0_i32_0 = arith.constant 0 : i32
    %c0_i32_1 = arith.constant 0 : i32
    return %c0_i32, %c0_i32_0 : i32, i32
  }
  func.func @transform_5(%arg0: i32) -> (i32, i32) {
    %c0_i32 = arith.constant 0 : i32
    %c0_i32_0 = arith.constant 0 : i32
    %c0_i32_1 = arith.constant 0 : i32
    return %c0_i32, %c0_i32_0 : i32, i32
  }
  func.func @transform_6(%arg0: i32) -> (i32, i32) {
    %c0_i32 = arith.constant 0 : i32
    %c0_i32_0 = arith.constant 0 : i32
    %c0_i32_1 = arith.constant 0 : i32
    return %c0_i32, %c0_i32_0 : i32, i32
  }
  func.func @transform_7(%arg0: i32) -> (i32, i32) {
    %c0_i32 = arith.constant 0 : i32
    %c0_i32_0 = arith.constant 0 : i32
    %c0_i32_1 = arith.constant 0 : i32
    return %c0_i32, %c0_i32_0 : i32, i32
  }
  func.func @transform_8(%arg0: i32) -> (i32, i32) {
    %c0_i32 = arith.constant 0 : i32
    %c0_i32_0 = arith.constant 0 : i32
    %c0_i32_1 = arith.constant 0 : i32
    return %c0_i32, %c0_i32_0 : i32, i32
  }
  func.func @transform_9(%arg0: i32) -> (i32, i32) {
    %c0_i32 = arith.constant 0 : i32
    %c0_i32_0 = arith.constant 0 : i32
    return %arg0, %c0_i32 : i32, i32
  }
}

</mosaic_0001>

<llo_original>
// kernel: tpu_custom_call.1
$region0: #{tpu_custom_call.1}
  #allocation0 [shape = 'u32[]', space=smem, size = 0x4, offset = 0x4, fixed_abs, tag = 'smem constant byte address 0x4 - core index']
  #allocation1 [shape = 'u32[144,128]{1,0:T(1,128)}', space=vmem, size = 0x12000, scoped, tag = 'internal scratch']
  %s0 = inlined_call_operand.vmem [shape: f32[8,3], index: 0, kind: input, shape index: {}]
  %s1 = inlined_call_operand.vmem [shape: f32[3,128], index: 1, kind: input, shape index: {}]
  %s2 = inlined_call_operand.vmem [shape: f32[1,128], index: 2, kind: input, shape index: {}]
  %s3 = inlined_call_operand.vmem [shape: f32[128,128], index: 3, kind: input, shape index: {}]
  %s4 = inlined_call_operand.vmem [shape: f32[1,128], index: 4, kind: input, shape index: {}]
  %s5 = inlined_call_operand.hbm [shape: f32[128,128], index: 5, kind: input, shape index: {}]
  %s6 = inlined_call_operand.vmem [shape: f32[1,128], index: 6, kind: input, shape index: {}]
  %s7 = inlined_call_operand.vmem [shape: f32[128,8], index: 7, kind: input, shape index: {}]
  %s8 = inlined_call_operand.vmem [shape: f32[1,8], index: 8, kind: input, shape index: {}]
  %s9 = inlined_call_operand.hbm [shape: f32[8,8], index: 9, kind: output, shape index: {}]
  %s10 = sld [smem:[#allocation0]]
  $region50: #{tpu_custom_call.1} parent=0
    _
  %s12 = ssub.s32 1, %s10
  %s13 = scalar_select 0, %s12, %s10
  $region1: #{tpu_custom_call.1} parent=0
    #allocation2 [shape = 'u8[65536]{0}', space=vmem, size = 0x10000, scoped, tag = 'input window, operand 5, single buffered']
    #allocation3 [shape = 's32[1]{0}', space=sflag, size = 0x4, scoped, tag = 'scoped memory for tpu_custom_call.1']
    #allocation4 [shape = 's32[1]{0}', space=sflag, size = 0x4, scoped, tag = 'scoped memory for tpu_custom_call.1']
    #allocation5 [shape = 'u8[4096]{0}', space=vmem, size = 0x1000, scoped, tag = 'output window, operand 0, single buffered']
    %14 = vsyncpa [#allocation3], 0
    %15 = vsyncpa [#allocation4], 0
    // Predicated region
    $region2: #{tpu_custom_call.1} parent=1 // pred_check
      _
    $region3: #{tpu_custom_call.1} parent=1 // pred_check_branch
      %17 = sbr.rel (0) target = $region5
    $region4: #{tpu_custom_call.1} parent=1 // pred_region
      _
    $region5: #{tpu_custom_call.1} parent=1 // pred_fallthru
      _
    // Predicated region
    $region6: #{tpu_custom_call.1} parent=1 // pred_check
      _
    $region7: #{tpu_custom_call.1} parent=1 // pred_check_branch
      %19 = sbr.rel (0) target = $region9
    $region8: #{tpu_custom_call.1} parent=1 // pred_region
      _
    $region9: #{tpu_custom_call.1} parent=1 // pred_fallthru
      _
    // Predicated region
    $region10: #{tpu_custom_call.1} parent=1 // pred_check
      _
    $region11: #{tpu_custom_call.1} parent=1 // pred_check_branch
      %21 = sbr.rel (0) target = $region13
    $region12: #{tpu_custom_call.1} parent=1 // pred_region
      _
    $region13: #{tpu_custom_call.1} parent=1 // pred_fallthru
      _
    // Predicated region
    $region14: #{tpu_custom_call.1} parent=1 // pred_check
      _
    $region15: #{tpu_custom_call.1} parent=1 // pred_check_branch
      %23 = sbr.rel (0) target = $region17
    $region16: #{tpu_custom_call.1} parent=1 // pred_region
      _
    $region17: #{tpu_custom_call.1} parent=1 // pred_fallthru
      _
    // Predicated region
    $region18: #{tpu_custom_call.1} parent=1 // pred_check
      _
    $region19: #{tpu_custom_call.1} parent=1 // pred_check_branch
      %25 = sbr.rel (0) target = $region21
    $region20: #{tpu_custom_call.1} parent=1 // pred_region
      _
    $region21: #{tpu_custom_call.1} parent=1 // pred_fallthru
      _
    // Predicated region
    $region22: #{tpu_custom_call.1} parent=1 // pred_check
      _
    $region23: #{tpu_custom_call.1} parent=1 // pred_check_branch
      %27 = sbr.rel (0) target = $region25
    $region24: #{tpu_custom_call.1} parent=1 // pred_region
      %s29 = ssub.s32 2048, 2048
      %30 = vsyncadd [#allocation3], %s29
      %s31 = sshll.u32 [#allocation2], 4
      %s32 = int_to_ptr.vmem [resolvable:$true] %s31
      %37 = dma.hbm_to_vmem [thread:$0]  %s5, 2048, %s32, [#allocation3], 128, 128, 8
    $region25: #{tpu_custom_call.1} parent=1 // pred_fallthru
      _
    // Predicated region
    $region26: #{tpu_custom_call.1} parent=1 // pred_check
      _
    $region27: #{tpu_custom_call.1} parent=1 // pred_check_branch
      %39 = sbr.rel (0) target = $region29
    $region28: #{tpu_custom_call.1} parent=1 // pred_region
      _
    $region29: #{tpu_custom_call.1} parent=1 // pred_fallthru
      _
    // Predicated region
    $region30: #{tpu_custom_call.1} parent=1 // pred_check
      _
    $region31: #{tpu_custom_call.1} parent=1 // pred_check_branch
      %41 = sbr.rel (0) target = $region33
    $region32: #{tpu_custom_call.1} parent=1 // pred_region
      _
    $region33: #{tpu_custom_call.1} parent=1 // pred_fallthru
      _
    // Predicated region
    $region34: #{tpu_custom_call.1} parent=1 // pred_check
      _
    $region35: #{tpu_custom_call.1} parent=1 // pred_check_branch
      %43 = sbr.rel (0) target = $region37
    $region36: #{tpu_custom_call.1} parent=1 // pred_region
      _
    $region37: #{tpu_custom_call.1} parent=1 // pred_fallthru
      _
    // Predicated region
    $region38: #{tpu_custom_call.1} parent=1 // pred_check
      _
    $region39: #{tpu_custom_call.1} parent=1 // pred_check_branch
      %45 = sbr.rel (0) target = $region41
    $region40: #{tpu_custom_call.1} parent=1 // pred_region
      %46 = dma.done [#allocation3], 2048
    $region41: #{tpu_custom_call.1} parent=1 // pred_fallthru
      _
    %v47 = vld [vmem:[%s0] sm:$0xff]
    %v48 = vld [vmem:[%s1] sm:$0x1]
    %50 = vset.pattern.permute.xlu0 0
    %51 = vperm.xlu0 %50, %v47
    %v52 = vpop.permute.xlu0 %51
    %v54 = vlaneseq
    %v55 = vshrl.u32 %v54, 7
    %v56 = vsub.s32 0, %v55
    %v57 = vrot.slane %v48, %v56
    %v58 = vmul.f32 %v52, %v57
    %v59 = vld [vmem:[%s1 + $0x1] sm:$0x1]
    %60 = vset.pattern.permute.xlu0 1
    %61 = vperm.xlu0 %60, %v47
    %v62 = vpop.permute.xlu0 %61
    %v64 = vlaneseq
    %v65 = vshrl.u32 %v64, 7
    %v66 = vsub.s32 0, %v65
    %v67 = vrot.slane %v59, %v66
    %v68 = vmul.f32 %v62, %v67
    %v69 = vadd.f32 %v58, %v68
    %v70 = vld [vmem:[%s1 + $0x2] sm:$0x1]
    %71 = vset.pattern.permute.xlu0 2
    %72 = vperm.xlu0 %71, %v47
    %v73 = vpop.permute.xlu0 %72
    %v75 = vlaneseq
    %v76 = vshrl.u32 %v75, 7
    %v77 = vsub.s32 0, %v76
    %v78 = vrot.slane %v70, %v77
    %v79 = vmul.f32 %v73, %v78
    %v80 = vadd.f32 %v69, %v79
    %v81 = vld [vmem:[%s2] sm:$0x1]
    %v83 = vlaneseq
    %v84 = vshrl.u32 %v83, 7
    %v85 = vsub.s32 0, %v84
    %v86 = vrot.slane %v81, %v85
    %v88 = vadd.f32 %v80, %v86
    %v89 = vmax.f32 %v88, 0.0
    %v90 = vld [vmem:[%s3] sm:$0xff]
    %v91 = vld [vmem:[%s3 + $0x8] sm:$0xff]
    %v92 = vld [vmem:[%s3 + $0x10] sm:$0xff]
    %v93 = vld [vmem:[%s3 + $0x18] sm:$0xff]
    %v94 = vld [vmem:[%s3 + $0x20] sm:$0xff]
    %v95 = vld [vmem:[%s3 + $0x28] sm:$0xff]
    %v96 = vld [vmem:[%s3 + $0x30] sm:$0xff]
    %v97 = vld [vmem:[%s3 + $0x38] sm:$0xff]
    %v98 = vld [vmem:[%s3 + $0x40] sm:$0xff]
    %v99 = vld [vmem:[%s3 + $0x48] sm:$0xff]
    %v100 = vld [vmem:[%s3 + $0x50] sm:$0xff]
    %v101 = vld [vmem:[%s3 + $0x58] sm:$0xff]
    %v102 = vld [vmem:[%s3 + $0x60] sm:$0xff]
    %v103 = vld [vmem:[%s3 + $0x68] sm:$0xff]
    %v104 = vld [vmem:[%s3 + $0x70] sm:$0xff]
    %v105 = vld [vmem:[%s3 + $0x78] sm:$0xff]
    %v106 = vld [vmem:[%s4] sm:$0x1]
    %v108 = vlaneseq
    %v109 = vshrl.u32 %v108, 7
    %v110 = vsub.s32 0, %v109
    %v111 = vrot.slane %v106, %v110
    %113 = vmatprep.subr.mxu0 0.0
    %114 = vmatpush1.msra.mxu0 %v105
    %115 = vmatprep.subr.mxu0 0.0
    %116 = vmatpush1.msra.mxu0 %v104
    %117 = vmatprep.subr.mxu0 0.0
    %118 = vmatpush1.msra.mxu0 %v103
    %119 = vmatprep.subr.mxu0 0.0
    %120 = vmatpush1.msra.mxu0 %v102
    %121 = vmatprep.subr.mxu0 0.0
    %122 = vmatpush1.msra.mxu0 %v101
    %123 = vmatprep.subr.mxu0 0.0
    %124 = vmatpush1.msra.mxu0 %v100
    %125 = vmatprep.subr.mxu0 0.0
    %126 = vmatpush1.msra.mxu0 %v99
    %127 = vmatprep.subr.mxu0 0.0
    %128 = vmatpush1.msra.mxu0 %v98
    %129 = vmatprep.subr.mxu0 0.0
    %130 = vmatpush1.msra.mxu0 %v97
    %131 = vmatprep.subr.mxu0 0.0
    %132 = vmatpush1.msra.mxu0 %v96
    %133 = vmatprep.subr.mxu0 0.0
    %134 = vmatpush1.msra.mxu0 %v95
    %135 = vmatprep.subr.mxu0 0.0
    %136 = vmatpush1.msra.mxu0 %v94
    %137 = vmatprep.subr.mxu0 0.0
    %138 = vmatpush1.msra.mxu0 %v93
    %139 = vmatprep.subr.mxu0 0.0
    %140 = vmatpush1.msra.mxu0 %v92
    %141 = vmatprep.subr.mxu0 0.0
    %142 = vmatpush1.msra.mxu0 %v91
    %143 = vmatprep.subr.mxu0 0.0
    %144 = vmatpush1.msra.mxu0 %v90
    %145 = vmatprep.subr.mxu0 0.0
    %146 = vmatpush2.msra.mxu0 0.0
    %147 = vmatprep.subr.mxu0 0.0
    %148 = vmatpush2.msra.mxu0 0.0
    %149 = vmatprep.subr.mxu0 0.0
    %150 = vmatpush2.msra.mxu0 0.0
    %151 = vmatprep.subr.mxu0 0.0
    %152 = vmatpush2.msra.mxu0 0.0
    %153 = vmatprep.subr.mxu0 0.0
    %154 = vmatpush2.msra.mxu0 0.0
    %155 = vmatprep.subr.mxu0 0.0
    %156 = vmatpush2.msra.mxu0 0.0
    %157 = vmatprep.subr.mxu0 0.0
    %158 = vmatpush2.msra.mxu0 0.0
    %159 = vmatprep.subr.mxu0 0.0
    %160 = vmatpush2.msra.mxu0 0.0
    %161 = vmatprep.subr.mxu0 0.0
    %162 = vmatpush2.msra.mxu0 0.0
    %163 = vmatprep.subr.mxu0 0.0
    %164 = vmatpush2.msra.mxu0 0.0
    %165 = vmatprep.subr.mxu0 0.0
    %166 = vmatpush2.msra.mxu0 0.0
    %167 = vmatprep.subr.mxu0 0.0
    %168 = vmatpush2.msra.mxu0 0.0
    %169 = vmatprep.subr.mxu0 0.0
    %170 = vmatpush2.msra.mxu0 0.0
    %171 = vmatprep.subr.mxu0 0.0
    %172 = vmatpush2.msra.mxu0 0.0
    %173 = vmatprep.subr.mxu0 0.0
    %174 = vmatpush2.msra.mxu0 0.0
    %175 = vmatprep.subr.mxu0 0.0
    %176 = vmatpush2.msra.mxu0 0.0
    %177 = vmatprep.mubr.f32.mxu0 0.0
    %178 = vmatmul.mubr.f32.gmra.mxu0 %v89
    %v179 = vpop.f32.mrf.mxu0
    %v180 = vadd.f32 %v111, %v179
    %v181 = vpop.f32.mrf.mxu0
    %182 = vdwg.mxu0
    %v183 = vmax.f32 %v180, 0.0
    %v184 = vld [vmem:[#allocation2] sm:$0xff]
    %v185 = vld [vmem:[#allocation2 + $0x8] sm:$0xff]
    %v186 = vld [vmem:[#allocation2 + $0x10] sm:$0xff]
    %v187 = vld [vmem:[#allocation2 + $0x18] sm:$0xff]
    %v188 = vld [vmem:[#allocation2 + $0x20] sm:$0xff]
    %v189 = vld [vmem:[#allocation2 + $0x28] sm:$0xff]
    %v190 = vld [vmem:[#allocation2 + $0x30] sm:$0xff]
    %v191 = vld [vmem:[#allocation2 + $0x38] sm:$0xff]
    %v192 = vld [vmem:[#allocation2 + $0x40] sm:$0xff]
    %v193 = vld [vmem:[#allocation2 + $0x48] sm:$0xff]
    %v194 = vld [vmem:[#allocation2 + $0x50] sm:$0xff]
    %v195 = vld [vmem:[#allocation2 + $0x58] sm:$0xff]
    %v196 = vld [vmem:[#allocation2 + $0x60] sm:$0xff]
    %v197 = vld [vmem:[#allocation2 + $0x68] sm:$0xff]
    %v198 = vld [vmem:[#allocation2 + $0x70] sm:$0xff]
    %v199 = vld [vmem:[#allocation2 + $0x78] sm:$0xff]
    %v200 = vld [vmem:[%s6] sm:$0x1]
    %v202 = vlaneseq
    %v203 = vshrl.u32 %v202, 7
    %v204 = vsub.s32 0, %v203
    %v205 = vrot.slane %v200, %v204
    %207 = vmatprep.subr.mxu0 0.0
    %208 = vmatpush1.msra.mxu0 %v199
    %209 = vmatprep.subr.mxu0 0.0
    %210 = vmatpush1.msra.mxu0 %v198
    %211 = vmatprep.subr.mxu0 0.0
    %212 = vmatpush1.msra.mxu0 %v197
    %213 = vmatprep.subr.mxu0 0.0
    %214 = vmatpush1.msra.mxu0 %v196
    %215 = vmatprep.subr.mxu0 0.0
    %216 = vmatpush1.msra.mxu0 %v195
    %217 = vmatprep.subr.mxu0 0.0
    %218 = vmatpush1.msra.mxu0 %v194
    %219 = vmatprep.subr.mxu0 0.0
    %220 = vmatpush1.msra.mxu0 %v193
    %221 = vmatprep.subr.mxu0 0.0
    %222 = vmatpush1.msra.mxu0 %v192
    %223 = vmatprep.subr.mxu0 0.0
    %224 = vmatpush1.msra.mxu0 %v191
    %225 = vmatprep.subr.mxu0 0.0
    %226 = vmatpush1.msra.mxu0 %v190
    %227 = vmatprep.subr.mxu0 0.0
    %228 = vmatpush1.msra.mxu0 %v189
    %229 = vmatprep.subr.mxu0 0.0
    %230 = vmatpush1.msra.mxu0 %v188
    %231 = vmatprep.subr.mxu0 0.0
    %232 = vmatpush1.msra.mxu0 %v187
    %233 = vmatprep.subr.mxu0 0.0
    %234 = vmatpush1.msra.mxu0 %v186
    %235 = vmatprep.subr.mxu0 0.0
    %236 = vmatpush1.msra.mxu0 %v185
    %237 = vmatprep.subr.mxu0 0.0
    %238 = vmatpush1.msra.mxu0 %v184
    %239 = vmatprep.subr.mxu0 0.0
    %240 = vmatpush2.msra.mxu0 0.0
    %241 = vmatprep.subr.mxu0 0.0
    %242 = vmatpush2.msra.mxu0 0.0
    %243 = vmatprep.subr.mxu0 0.0
    %244 = vmatpush2.msra.mxu0 0.0
    %245 = vmatprep.subr.mxu0 0.0
    %246 = vmatpush2.msra.mxu0 0.0
    %247 = vmatprep.subr.mxu0 0.0
    %248 = vmatpush2.msra.mxu0 0.0
    %249 = vmatprep.subr.mxu0 0.0
    %250 = vmatpush2.msra.mxu0 0.0
    %251 = vmatprep.subr.mxu0 0.0
    %252 = vmatpush2.msra.mxu0 0.0
    %253 = vmatprep.subr.mxu0 0.0
    %254 = vmatpush2.msra.mxu0 0.0
    %255 = vmatprep.subr.mxu0 0.0
    %256 = vmatpush2.msra.mxu0 0.0
    %257 = vmatprep.subr.mxu0 0.0
    %258 = vmatpush2.msra.mxu0 0.0
    %259 = vmatprep.subr.mxu0 0.0
    %260 = vmatpush2.msra.mxu0 0.0
    %261 = vmatprep.subr.mxu0 0.0
    %262 = vmatpush2.msra.mxu0 0.0
    %263 = vmatprep.subr.mxu0 0.0
    %264 = vmatpush2.msra.mxu0 0.0
    %265 = vmatprep.subr.mxu0 0.0
    %266 = vmatpush2.msra.mxu0 0.0
    %267 = vmatprep.subr.mxu0 0.0
    %268 = vmatpush2.msra.mxu0 0.0
    %269 = vmatprep.subr.mxu0 0.0
    %270 = vmatpush2.msra.mxu0 0.0
    %271 = vmatprep.mubr.f32.mxu0 0.0
    %272 = vmatmul.mubr.f32.gmra.mxu0 %v183
    %v273 = vpop.f32.mrf.mxu0
    %v274 = vadd.f32 %v205, %v273
    %v275 = vpop.f32.mrf.mxu0
    %276 = vdwg.mxu0
    %v277 = vmax.f32 %v274, 0.0
    %v278 = vld [vmem:[%s7] sm:$0xff]
    %v279 = vld [vmem:[%s7 + $0x8] sm:$0xff]
    %v280 = vld [vmem:[%s7 + $0x10] sm:$0xff]
    %v281 = vld [vmem:[%s7 + $0x18] sm:$0xff]
    %v282 = vld [vmem:[%s7 + $0x20] sm:$0xff]
    %v283 = vld [vmem:[%s7 + $0x28] sm:$0xff]
    %v284 = vld [vmem:[%s7 + $0x30] sm:$0xff]
    %v285 = vld [vmem:[%s7 + $0x38] sm:$0xff]
    %v286 = vld [vmem:[%s7 + $0x40] sm:$0xff]
    %v287 = vld [vmem:[%s7 + $0x48] sm:$0xff]
    %v288 = vld [vmem:[%s7 + $0x50] sm:$0xff]
    %v289 = vld [vmem:[%s7 + $0x58] sm:$0xff]
    %v290 = vld [vmem:[%s7 + $0x60] sm:$0xff]
    %v291 = vld [vmem:[%s7 + $0x68] sm:$0xff]
    %v292 = vld [vmem:[%s7 + $0x70] sm:$0xff]
    %v293 = vld [vmem:[%s7 + $0x78] sm:$0xff]
    %v294 = vld [vmem:[%s8] sm:$0x1]
    %v296 = vlaneseq
    %v297 = vshrl.u32 %v296, 7
    %v298 = vsub.s32 0, %v297
    %v299 = vrot.slane %v294, %v298
    %301 = vmatprep.subr.mxu0 0.0
    %302 = vmatpush1.msra.mxu0 %v293
    %303 = vmatprep.subr.mxu0 0.0
    %304 = vmatpush1.msra.mxu0 %v292
    %305 = vmatprep.subr.mxu0 0.0
    %306 = vmatpush1.msra.mxu0 %v291
    %307 = vmatprep.subr.mxu0 0.0
    %308 = vmatpush1.msra.mxu0 %v290
    %309 = vmatprep.subr.mxu0 0.0
    %310 = vmatpush1.msra.mxu0 %v289
    %311 = vmatprep.subr.mxu0 0.0
    %312 = vmatpush1.msra.mxu0 %v288
    %313 = vmatprep.subr.mxu0 0.0
    %314 = vmatpush1.msra.mxu0 %v287
    %315 = vmatprep.subr.mxu0 0.0
    %316 = vmatpush1.msra.mxu0 %v286
    %317 = vmatprep.subr.mxu0 0.0
    %318 = vmatpush1.msra.mxu0 %v285
    %319 = vmatprep.subr.mxu0 0.0
    %320 = vmatpush1.msra.mxu0 %v284
    %321 = vmatprep.subr.mxu0 0.0
    %322 = vmatpush1.msra.mxu0 %v283
    %323 = vmatprep.subr.mxu0 0.0
    %324 = vmatpush1.msra.mxu0 %v282
    %325 = vmatprep.subr.mxu0 0.0
    %326 = vmatpush1.msra.mxu0 %v281
    %327 = vmatprep.subr.mxu0 0.0
    %328 = vmatpush1.msra.mxu0 %v280
    %329 = vmatprep.subr.mxu0 0.0
    %330 = vmatpush1.msra.mxu0 %v279
    %331 = vmatprep.subr.mxu0 0.0
    %332 = vmatpush1.msra.mxu0 %v278
    %333 = vmatprep.subr.mxu0 0.0
    %334 = vmatpush2.msra.mxu0 0.0
    %335 = vmatprep.subr.mxu0 0.0
    %336 = vmatpush2.msra.mxu0 0.0
    %337 = vmatprep.subr.mxu0 0.0
    %338 = vmatpush2.msra.mxu0 0.0
    %339 = vmatprep.subr.mxu0 0.0
    %340 = vmatpush2.msra.mxu0 0.0
    %341 = vmatprep.subr.mxu0 0.0
    %342 = vmatpush2.msra.mxu0 0.0
    %343 = vmatprep.subr.mxu0 0.0
    %344 = vmatpush2.msra.mxu0 0.0
    %345 = vmatprep.subr.mxu0 0.0
    %346 = vmatpush2.msra.mxu0 0.0
    %347 = vmatprep.subr.mxu0 0.0
    %348 = vmatpush2.msra.mxu0 0.0
    %349 = vmatprep.subr.mxu0 0.0
    %350 = vmatpush2.msra.mxu0 0.0
    %351 = vmatprep.subr.mxu0 0.0
    %352 = vmatpush2.msra.mxu0 0.0
    %353 = vmatprep.subr.mxu0 0.0
    %354 = vmatpush2.msra.mxu0 0.0
    %355 = vmatprep.subr.mxu0 0.0
    %356 = vmatpush2.msra.mxu0 0.0
    %357 = vmatprep.subr.mxu0 0.0
    %358 = vmatpush2.msra.mxu0 0.0
    %359 = vmatprep.subr.mxu0 0.0
    %360 = vmatpush2.msra.mxu0 0.0
    %361 = vmatprep.subr.mxu0 0.0
    %362 = vmatpush2.msra.mxu0 0.0
    %363 = vmatprep.subr.mxu0 0.0
    %364 = vmatpush2.msra.mxu0 0.0
    %365 = vmatprep.mubr.f32.mxu0 0.0
    %366 = vmatmul.mubr.f32.gmra.mxu0 %v277
    %v367 = vpop.f32.mrf.mxu0
    %v368 = vadd.f32 %v299, %v367
    %v369 = vpop.f32.mrf.mxu0
    %370 = vdwg.mxu0
    %vm371 = vcmask 64512
    %372 = vst.msk [vmem:[#allocation5] sm:$0xff] %vm371, %v368
    // Predicated region
    $region42: #{tpu_custom_call.1} parent=1 // pred_check
      _
    $region43: #{tpu_custom_call.1} parent=1 // pred_check_branch
      %374 = sbr.rel (0) target = $region45
    $region44: #{tpu_custom_call.1} parent=1 // pred_region
      %s376 = ssub.s32 128, 128
      %377 = vsyncadd [#allocation4], %s376
      %s379 = sshll.u32 [#allocation5], 4
      %s380 = int_to_ptr.vmem [resolvable:$true] %s379
      %382 = dma.vmem_to_hbm [thread:$0]  %s380, 128, %s9, [#allocation4]
    $region45: #{tpu_custom_call.1} parent=1 // pred_fallthru
      _
    // Predicated region
    $region46: #{tpu_custom_call.1} parent=1 // pred_check
      _
    $region47: #{tpu_custom_call.1} parent=1 // pred_check_branch
      %384 = sbr.rel (0) target = $region49
    $region48: #{tpu_custom_call.1} parent=1 // pred_region
      %385 = dma.done [#allocation4], 128
    $region49: #{tpu_custom_call.1} parent=1 // pred_fallthru
      _
    %386 = vsyncpa [#allocation3], 1
    %387 = vsyncpa [#allocation4], 1

</llo_original>
